<compile_context>
chip_gen: v7x
topology: tpu7x:2x2x1
jax: 0.10.0
libtpu: 0.0.40
codegen_flags: <defaults>
</compile_context>

<pallas_src>
import functools

import jax
import jax.numpy as jnp
from jax import lax
from jax.experimental import pallas as pl
from jax.experimental.pallas import tpu as pltpu


# ---------------------------------------------------------------------------
# tunables
# ---------------------------------------------------------------------------
_STREAM_BUDGET = 24 * 1024 * 1024   # bytes of double-buffered streaming per pass
_ROW_CAP = 1024                     # max rows per tile (pipelining granularity)
_VMEM_LIMIT = 48 * 1024 * 1024      # scoped VMEM limit for every pallas_call


def _row_step(dtype):
    """Row granularity honoring sublane packing: 8 f32, 16 bf16, 32 int8/fp8."""
    return max(8, 32 // jnp.dtype(dtype).itemsize)


def _rows_tile(total_rows, lanes, itemsize, n_streams, step, budget):
    """Pick (row_tile, padded_rows).

    Full extent when the whole axis fits the streaming budget, else the largest
    multiple-of-`step` exact divisor <= cap, else a capped tile with explicit
    row zero-padding (padded_rows > total_rows)."""
    per_row = 2 * n_streams * lanes * itemsize          # double-buffered bytes/row
    if total_rows * per_row <= budget:
        return total_rows, total_rows                   # one full-extent block
    cap = max(step, min(_ROW_CAP, (budget // per_row) // step * step))
    t = cap
    while t >= step:
        if total_rows % t == 0:
            return t, total_rows
        t -= step
    padded = -(-total_rows // cap) * cap
    return cap, padded


def _pad_rows(x, rows):
    pad = rows - x.shape[1]
    if pad == 0:
        return x
    return jnp.pad(x, ((0, 0), (0, pad), (0, 0)))


# ---------------------------------------------------------------------------
# Fused kernel: pool -> channel MLP -> softmax pair -> reweight, one HBM pass
# ---------------------------------------------------------------------------
def _fused_kernel(featT_ref, featV_ref, w1_ref, wT_ref, wV_ref, out_ref, *,
                  hw_total):
    ft = featT_ref[...]                                   # (HW, Cp) native dtype
    fv = featV_ref[...]

    # Global avg/max pooling; sums accumulate in f32, max is exact in native dt.
    sumT = jnp.sum(ft, axis=0, keepdims=True, dtype=jnp.float32)   # (1, Cp)
    sumV = jnp.sum(fv, axis=0, keepdims=True, dtype=jnp.float32)
    maxT = jnp.max(ft, axis=0, keepdims=True).astype(jnp.float32)
    maxV = jnp.max(fv, axis=0, keepdims=True).astype(jnp.float32)

    # pooling of channel-concatenated x == concat of per-branch poolings
    inv_hw = jnp.float32(1.0 / hw_total)
    avg_x = jnp.concatenate([sumT, sumV], axis=-1) * inv_hw        # (1, 2Cp)
    max_x = jnp.concatenate([maxT, maxV], axis=-1)
    pooled = jnp.concatenate([avg_x, max_x], axis=0)               # (2, 2Cp)

    # sharedMLP (1x1 conv, no bias) + ReLU for avg & max in ONE MXU matmul;
    # convT(h_avg)+convT(h_max) == (h_avg+h_max) @ wT  (distributivity).
    w1 = w1_ref[...].astype(jnp.float32)
    h = jnp.maximum(jnp.dot(pooled, w1, preferred_element_type=jnp.float32), 0.0)
    h_sum = h[0:1, :] + h[1:2, :]                                  # (1, hidden)
    tT = jnp.dot(h_sum, wT_ref[...].astype(jnp.float32),
                 preferred_element_type=jnp.float32)               # (1, Cp)
    tV = jnp.dot(h_sum, wV_ref[...].astype(jnp.float32),
                 preferred_element_type=jnp.float32)               # (1, Cp)

    # pairwise softmax over (T, V): wV = sigmoid(tV - tT), wT = 1 - wV
    wv = (1.0 / (1.0 + jnp.exp(tT - tV))).astype(ft.dtype)         # (1, Cp)

    # out = wT*featT + wV*featV == featT + wV*(featV - featT)
    out_ref[...] = (ft + wv * (fv - ft)).astype(out_ref.dtype)


# ---------------------------------------------------------------------------
# Two-pass path, pass 1: global sum/max pooling (no weights in the kernel)
# ---------------------------------------------------------------------------
def _pool_kernel(featT_ref, featV_ref, stats_ref, *, rem):
    """Accumulates [sumT, maxT, sumV, maxV] into the resident f32 output block.

    `rem` (static) is the number of valid rows in the last HW tile when the
    row axis was zero-padded; padded rows are harmless for the sums and masked
    for the maxes.  rem == 0 means the tiles cover HW exactly."""
    t = pl.program_id(2)
    nt = pl.num_programs(2)

    ft = featT_ref[...]                                   # (T1, Tc) native dtype
    fv = featV_ref[...]
    ft_m, fv_m = ft, fv
    if rem:
        rows = lax.broadcasted_iota(jnp.int32, ft.shape, 0)
        valid = jnp.where(t == nt - 1, rem, ft.shape[0])
        neg = jnp.array(jnp.finfo(ft.dtype).min, dtype=ft.dtype)
        ft_m = jnp.where(rows < valid, ft, neg)
        fv_m = jnp.where(rows < valid, fv, neg)

    sT = jnp.sum(ft, axis=0, keepdims=True, dtype=jnp.float32)     # (1, Tc)
    sV = jnp.sum(fv, axis=0, keepdims=True, dtype=jnp.float32)
    mT = jnp.max(ft_m, axis=0, keepdims=True).astype(jnp.float32)
    mV = jnp.max(fv_m, axis=0, keepdims=True).astype(jnp.float32)
    tile = jnp.concatenate([sT, mT, sV, mV], axis=0)               # (4, Tc)

    @pl.when(t == 0)
    def _init():
        stats_ref[...] = tile

    @pl.when(t > 0)
    def _acc():
        prev = stats_ref[...]
        stats_ref[...] = jnp.concatenate(
            [prev[0:1] + sT, jnp.maximum(prev[1:2], mT),
             prev[2:3] + sV, jnp.maximum(prev[3:4], mV)], axis=0)


# ---------------------------------------------------------------------------
# Two-pass path, pass 2: lane-dense broadcast re-weighting
# ---------------------------------------------------------------------------
def _reweight_kernel(wv_ref, featT_ref, featV_ref, out_ref):
    """out = wT*featT + wV*featV  ==  featT + wV*(featV - featT)  (wT+wV == 1)."""
    ft = featT_ref[...]
    fv = featV_ref[...]
    wv = wv_ref[...].astype(ft.dtype)                     # (1, Cl), lane-tiled
    out_ref[...] = (ft + wv * (fv - ft)).astype(out_ref.dtype)


# ---------------------------------------------------------------------------
# Wrapper for one `chx` block (flag1=True, flag2=False)
# ---------------------------------------------------------------------------
@functools.partial(jax.jit, static_argnames=("force_two_pass", "stream_budget"))
def chx_forward(featT, featV, w1, wT, wV, *, force_two_pass=False,
                stream_budget=_STREAM_BUDGET):
    """featT/featV: (N, H, W, Cp) NHWC.  Returns (N, H, W, Cp)."""
    N, H, W, Cp = featT.shape
    HW = H * W
    hidden = w1.shape[1]
    dt = featT.dtype
    itemsize = jnp.dtype(dt).itemsize
    step = _row_step(dt)
    cparams = functools.partial(pltpu.CompilerParams,
                                vmem_limit_bytes=_VMEM_LIMIT)

    ftr = featT.reshape(N, HW, Cp)
    fvr = featV.reshape(N, HW, Cp)

    weight_bytes = (w1.size + wT.size + wV.size) * jnp.dtype(w1.dtype).itemsize
    fuse_bytes = 3 * 2 * HW * Cp * itemsize + 2 * weight_bytes

    # ------------------ fused path: single HBM pass over the features -------
    if (not force_two_pass) and fuse_bytes <= stream_budget:
        out = pl.pallas_call(
            functools.partial(_fused_kernel, hw_total=HW),
            out_shape=jax.ShapeDtypeStruct((N, HW, Cp), dt),
            grid_spec=pltpu.PrefetchScalarGridSpec(
                num_scalar_prefetch=0,
                grid=(N,),
                in_specs=[
                    pl.BlockSpec((None, HW, Cp), lambda n: (n, 0, 0)),
                    pl.BlockSpec((None, HW, Cp), lambda n: (n, 0, 0)),
                    pl.BlockSpec((2 * Cp, hidden), lambda n: (0, 0)),
                    pl.BlockSpec((hidden, Cp), lambda n: (0, 0)),
                    pl.BlockSpec((hidden, Cp), lambda n: (0, 0)),
                ],
                out_specs=pl.BlockSpec((None, HW, Cp), lambda n: (n, 0, 0)),
            ),
            compiler_params=cparams(dimension_semantics=("parallel",)),
            cost_estimate=pl.CostEstimate(
                flops=N * (8 * HW * Cp + 8 * Cp * hidden),
                transcendentals=N * Cp,
                bytes_accessed=3 * N * HW * Cp * itemsize + 2 * weight_bytes),
        )(ftr, fvr, w1, wT, wV)
        return out.reshape(N, H, W, Cp)

    # ------------------ two-pass path (large levels) -------------------------
    # Pass 1: pooling only.  Channel tiling keeps per-tile VMEM bounded at big
    # Cp and gives megacore work when N is small; the MLP weights never enter
    # the kernel's (double-buffered) VMEM.
    Tc = Cp
    if Cp > 512 and Cp % 128 == 0:
        for cand in (512, 256, 128):
            if Cp % cand == 0:
                Tc = cand
                break
    n_c = Cp // Tc

    T1, HW1 = _rows_tile(HW, Tc, itemsize, 2, step, stream_budget)
    rem1 = 0 if HW1 == HW else HW % T1
    ft1 = _pad_rows(ftr, HW1)
    fv1 = _pad_rows(fvr, HW1)
    n_t1 = HW1 // T1

    stats = pl.pallas_call(
        functools.partial(_pool_kernel, rem=rem1),
        out_shape=jax.ShapeDtypeStruct((N, 4, Cp), jnp.float32),
        grid_spec=pltpu.PrefetchScalarGridSpec(
            num_scalar_prefetch=0,
            grid=(N, n_c, n_t1),
            in_specs=[
                pl.BlockSpec((None, T1, Tc), lambda n, c, t: (n, t, c)),
                pl.BlockSpec((None, T1, Tc), lambda n, c, t: (n, t, c)),
            ],
            out_specs=pl.BlockSpec((None, 4, Tc), lambda n, c, t: (n, 0, c)),
        ),
        compiler_params=cparams(
            dimension_semantics=("parallel", "parallel", "arbitrary")),
        cost_estimate=pl.CostEstimate(
            flops=4 * N * HW * Cp,
            transcendentals=0,
            bytes_accessed=2 * N * HW1 * Cp * itemsize + 4 * N * Cp * 4),
    )(ft1, fv1)

    # Tiny channel MLP + pairwise softmax (N x Cp scalars) in plain XLA, f32.
    w1f = w1.astype(jnp.float32)
    wTf = wT.astype(jnp.float32)
    wVf = wV.astype(jnp.float32)
    avg_x = jnp.concatenate([stats[:, 0], stats[:, 2]], axis=-1) * (1.0 / HW)
    max_x = jnp.concatenate([stats[:, 1], stats[:, 3]], axis=-1)
    h = jnp.maximum(avg_x @ w1f, 0.0) + jnp.maximum(max_x @ w1f, 0.0)
    wv = jax.nn.sigmoid(h @ wVf - h @ wTf)                # (N, Cp) == softmax V weight

    # Pass 2: lane-dense repack (HW, Cp) -> (HW//k, k*Cp) so stores are full
    # 128-lane vst's whenever 128 % Cp == 0; otherwise keep the native layout.
    k = 1
    if Cp % 128 != 0 and 128 % Cp == 0 and HW % (128 // Cp) == 0:
        k = 128 // Cp
    HWp = HW // k
    Cl = k * Cp
    ftp = featT.reshape(N, HWp, Cl)
    fvp = featV.reshape(N, HWp, Cl)
    wv_lane = wv[:, None, :] if k == 1 else jnp.tile(wv[:, None, :], (1, 1, k))

    T2, HW2 = _rows_tile(HWp, Cl, itemsize, 3, step, stream_budget)
    ft2 = _pad_rows(ftp, HW2)
    fv2 = _pad_rows(fvp, HW2)
    n_t2 = HW2 // T2

    out_packed = pl.pallas_call(
        _reweight_kernel,
        out_shape=jax.ShapeDtypeStruct((N, HW2, Cl), dt),
        grid_spec=pltpu.PrefetchScalarGridSpec(
            num_scalar_prefetch=0,
            grid=(N, n_t2),
            in_specs=[
                pl.BlockSpec((None, 1, Cl), lambda n, t: (n, 0, 0)),
                pl.BlockSpec((None, T2, Cl), lambda n, t: (n, t, 0)),
                pl.BlockSpec((None, T2, Cl), lambda n, t: (n, t, 0)),
            ],
            out_specs=pl.BlockSpec((None, T2, Cl), lambda n, t: (n, t, 0)),
        ),
        compiler_params=cparams(dimension_semantics=("parallel", "parallel")),
        cost_estimate=pl.CostEstimate(
            flops=3 * N * HW * Cp,
            transcendentals=0,
            bytes_accessed=3 * N * HW2 * Cl * itemsize),
    )(wv_lane, ft2, fv2)

    out = out_packed[:, :HWp, :] if HW2 != HWp else out_packed
    return out.reshape(N, H, W, Cp)


# ---------------------------------------------------------------------------
# Module wrapper
# ---------------------------------------------------------------------------
def _make_chx_params(planes, key):
    cp = planes // 2
    hidden = max(planes // 16, 1)       # ratio = 16
    k1, k2, k3 = jax.random.split(key, 3)
    # torch Conv2d 1x1 weights (out, in, 1, 1) stored as (in, out) matmul weights
    w1 = jax.random.normal(k1, (planes, hidden), jnp.float32) * 0.05
    wT = jax.random.normal(k2, (hidden, cp), jnp.float32) * 0.05
    wV = jax.random.normal(k3, (hidden, cp), jnp.float32) * 0.05
    return w1, wT, wV


class AttentionNeckPallas:
    """JAX/Pallas port of Attention_neck (flag1=True, flag2=False per chx)."""

    def __init__(self, in_channels=(64, 128, 256), key=None):
        if key is None:
            key = jax.random.PRNGKey(0)
        self.in_channels = tuple(in_channels)
        self.params = []
        for planes in self.in_channels:
            key, sub = jax.random.split(key)
            self.params.append(_make_chx_params(planes, sub))

    def __call__(self, x1, x2):
        feats = [x1[0]]
        for i in range(1, len(x1)):
            w1, wT, wV = self.params[i - 1]
            feats.append(chx_forward(x1[i], x2[i - 1], w1, wT, wV))
        return tuple(feats)


# ---------------- pure-JAX reference for correctness checking ----------------
def _chx_ref(featT, featV, w1, wT, wV):
    featT = featT.astype(jnp.float32)
    featV = featV.astype(jnp.float32)
    x = jnp.concatenate([featT, featV], axis=-1)        # (N,H,W,2Cp)
    avg = jnp.mean(x, axis=(1, 2))                      # (N,2Cp)
    mx = jnp.max(x, axis=(1, 2))                        # (N,2Cp)
    h_avg = jnp.maximum(avg @ w1, 0.0)
    h_max = jnp.maximum(mx @ w1, 0.0)
    tT = h_avg @ wT + h_max @ wT                        # (N,Cp)
    tV = h_avg @ wV + h_max @ wV
    w = jax.nn.softmax(jnp.stack([tT, tV], axis=-1), axis=-1)   # (N,Cp,2)
    wTc = w[..., 0][:, None, None, :]
    wVc = w[..., 1][:, None, None, :]
    return wTc * featT + wVc * featV


if __name__ == "__main__":
    key = jax.random.PRNGKey(0)
    in_channels = (64, 128, 256)           # small stand-in for [1024, 2048, 4096]
    neck = AttentionNeckPallas(in_channels=in_channels, key=jax.random.PRNGKey(0))

    N = 2
    level_shapes = [(16, 16, 32), (16, 16, 32), (8, 8, 64), (4, 4, 128)]
    ks = jax.random.split(key, 16)
    x1 = [jax.random.normal(ks[i], (N, h, w, c), jnp.float32)
          for i, (h, w, c) in enumerate(level_shapes)]
    x2 = [jax.random.normal(ks[4 + i], (N, h, w, c), jnp.float32)
          for i, (h, w, c) in enumerate(level_shapes[1:])]

    # 1) default (fused single-pass) path, f32, full neck
    feats = jax.block_until_ready(neck(x1, x2))
    assert jnp.allclose(feats[0], x1[0])
    for i in range(1, len(x1)):
        w1, wT, wV = neck.params[i - 1]
        ref = _chx_ref(x1[i], x2[i - 1], w1, wT, wV)
        assert feats[i].shape == x1[i].shape
        assert jnp.allclose(feats[i], ref, atol=1e-4, rtol=1e-4), \
            f"fused mismatch at level {i}"

    # 2) two-pass path (pooling kernel + XLA MLP + reweight kernel), divisible HW
    w1, wT, wV = neck.params[0]
    out_tp = jax.block_until_ready(
        chx_forward(x1[1], x2[0], w1, wT, wV, force_two_pass=True))
    ref_tp = _chx_ref(x1[1], x2[0], w1, wT, wV)
    assert jnp.allclose(out_tp, ref_tp, atol=1e-4, rtol=1e-4), "two-pass mismatch"

    # 3) two-pass with odd HW (33x33) and a tiny streaming budget: exercises the
    #    padded/masked row-tiling fallback in both passes.
    fodd_T = jax.random.normal(ks[8], (1, 33, 33, 32), jnp.float32)
    fodd_V = jax.random.normal(ks[9], (1, 33, 33, 32), jnp.float32)
    out_odd = jax.block_until_ready(
        chx_forward(fodd_T, fodd_V, w1, wT, wV, force_two_pass=True,
                    stream_budget=256 * 1024))
    ref_odd = _chx_ref(fodd_T, fodd_V, w1, wT, wV)
    assert jnp.allclose(out_odd, ref_odd, atol=1e-4, rtol=1e-4), "odd-HW mismatch"

    # 4) two-pass with a wide channel count: exercises the channel-tiled
    #    (megacore-friendly) pooling grid (Cp=1024 -> 2 channel tiles).
    planes_big = 2048
    wb1, wbT, wbV = _make_chx_params(planes_big, jax.random.PRNGKey(7))
    fb_T = jax.random.normal(ks[10], (1, 8, 8, planes_big // 2), jnp.float32)
    fb_V = jax.random.normal(ks[11], (1, 8, 8, planes_big // 2), jnp.float32)
    out_big = jax.block_until_ready(
        chx_forward(fb_T, fb_V, wb1, wbT, wbV, force_two_pass=True))
    ref_big = _chx_ref(fb_T, fb_V, wb1, wbT, wbV)
    assert jnp.allclose(out_big, ref_big, atol=1e-4, rtol=1e-4), \
        "wide-channel mismatch"

    # 5) bf16 feature path (fused); pooling/MLP still accumulate in f32
    ftb = x1[1].astype(jnp.bfloat16)
    fvb = x2[0].astype(jnp.bfloat16)
    out_b = jax.block_until_ready(chx_forward(ftb, fvb, w1, wT, wV))
    ref_b = _chx_ref(ftb, fvb, w1, wT, wV)
    assert out_b.dtype == jnp.bfloat16
    err = float(jnp.max(jnp.abs(out_b.astype(jnp.float32) - ref_b)))
    assert err < 0.25, f"bf16 path error too large: {err}"

    print("KERNEL_OK")
</pallas_src>

<mosaic_0001>
module attributes {stable_mosaic.version = 11 : i64} {
  func.func @_fused_kernel(%arg0: i32, %arg1: memref<1x256x32xf32, #tpu.memory_space<vmem>>, %arg2: memref<1x256x32xf32, #tpu.memory_space<vmem>>, %arg3: memref<64x4xf32, #tpu.memory_space<vmem>>, %arg4: memref<4x32xf32, #tpu.memory_space<vmem>>, %arg5: memref<4x32xf32, #tpu.memory_space<vmem>>, %arg6: memref<1x256x32xf32, #tpu.memory_space<vmem>>) attributes {dimension_semantics = [#tpu.dimension_semantics<parallel>], iteration_bounds = array<i64: 2>, scalar_prefetch = 0 : i64, scratch_operands = 0 : i64, tpu.core_type = #tpu.core_type<tc>, window_params = [{transform_indices = @transform_0, window_bounds = array<i64: 1, 256, 32>}, {transform_indices = @transform_1, window_bounds = array<i64: 1, 256, 32>}, {pipeline_mode = #tpu.pipeline_mode<synchronous>, transform_indices = @transform_2, window_bounds = array<i64: 64, 4>}, {pipeline_mode = #tpu.pipeline_mode<synchronous>, transform_indices = @transform_3, window_bounds = array<i64: 4, 32>}, {pipeline_mode = #tpu.pipeline_mode<synchronous>, transform_indices = @transform_4, window_bounds = array<i64: 4, 32>}, {transform_indices = @transform_5, window_bounds = array<i64: 1, 256, 32>}]} {
    %c0 = arith.constant 0 : index
    %c0_0 = arith.constant 0 : index
    %c0_1 = arith.constant 0 : index
    %0 = vector.load %arg1[%c0, %c0_0, %c0_1] : memref<1x256x32xf32, #tpu.memory_space<vmem>>, vector<1x256x32xf32>
    %1 = vector.shape_cast %0 : vector<1x256x32xf32> to vector<256x32xf32>
    %c0_2 = arith.constant 0 : index
    %c0_3 = arith.constant 0 : index
    %c0_4 = arith.constant 0 : index
    %2 = vector.load %arg2[%c0_2, %c0_3, %c0_4] : memref<1x256x32xf32, #tpu.memory_space<vmem>>, vector<1x256x32xf32>
    %3 = vector.shape_cast %2 : vector<1x256x32xf32> to vector<256x32xf32>
    %cst = arith.constant dense<0.000000e+00> : vector<32xf32>
    %4 = vector.multi_reduction <add>, %1, %cst [0] : vector<256x32xf32> to vector<32xf32>
    %5 = vector.shape_cast %4 : vector<32xf32> to vector<1x32xf32>
    %cst_5 = arith.constant dense<0.000000e+00> : vector<32xf32>
    %6 = vector.multi_reduction <add>, %3, %cst_5 [0] : vector<256x32xf32> to vector<32xf32>
    %7 = vector.shape_cast %6 : vector<32xf32> to vector<1x32xf32>
    %cst_6 = arith.constant dense<0xFF800000> : vector<32xf32>
    %8 = vector.multi_reduction <maximumf>, %1, %cst_6 [0] : vector<256x32xf32> to vector<32xf32>
    %9 = vector.shape_cast %8 : vector<32xf32> to vector<1x32xf32>
    %cst_7 = arith.constant dense<0xFF800000> : vector<32xf32>
    %10 = vector.multi_reduction <maximumf>, %3, %cst_7 [0] : vector<256x32xf32> to vector<32xf32>
    %11 = vector.shape_cast %10 : vector<32xf32> to vector<1x32xf32>
    %12 = tpu.concatenate %5, %7 in 1 : vector<1x32xf32>, vector<1x32xf32> -> vector<1x64xf32>
    %cst_8 = arith.constant 3.906250e-03 : f32
    %13 = vector.broadcast %cst_8 : f32 to vector<1x64xf32>
    %14 = arith.mulf %12, %13 : vector<1x64xf32>
    %15 = tpu.concatenate %9, %11 in 1 : vector<1x32xf32>, vector<1x32xf32> -> vector<1x64xf32>
    %16 = tpu.concatenate %14, %15 in 0 : vector<1x64xf32>, vector<1x64xf32> -> vector<2x64xf32>
    %c0_9 = arith.constant 0 : index
    %c0_10 = arith.constant 0 : index
    %17 = vector.load %arg3[%c0_9, %c0_10] : memref<64x4xf32, #tpu.memory_space<vmem>>, vector<64x4xf32>
    %cst_11 = arith.constant dense<0.000000e+00> : vector<2x4xf32>
    %18 = tpu.matmul %16, %17, %cst_11 {dimension_numbers = #tpu.dot_dimension_numbers<[1], [0], [0], [1], [0, 0, 1, 1], [], []>} : vector<2x64xf32>, vector<64x4xf32>, vector<2x4xf32> -> vector<2x4xf32>
    %cst_12 = arith.constant 0.000000e+00 : f32
    %19 = vector.broadcast %cst_12 : f32 to vector<2x4xf32>
    %20 = arith.maximumf %18, %19 : vector<2x4xf32>
    %21 = vector.extract_strided_slice %20 {offsets = [0, 0], sizes = [1, 4], strides = [1, 1]} : vector<2x4xf32> to vector<1x4xf32>
    %22 = vector.extract_strided_slice %20 {offsets = [1, 0], sizes = [1, 4], strides = [1, 1]} : vector<2x4xf32> to vector<1x4xf32>
    %23 = arith.addf %21, %22 : vector<1x4xf32>
    %c0_13 = arith.constant 0 : index
    %c0_14 = arith.constant 0 : index
    %24 = vector.load %arg4[%c0_13, %c0_14] : memref<4x32xf32, #tpu.memory_space<vmem>>, vector<4x32xf32>
    %cst_15 = arith.constant dense<0.000000e+00> : vector<1x32xf32>
    %25 = tpu.matmul %23, %24, %cst_15 {dimension_numbers = #tpu.dot_dimension_numbers<[1], [0], [0], [1], [0, 0, 1, 1], [], []>} : vector<1x4xf32>, vector<4x32xf32>, vector<1x32xf32> -> vector<1x32xf32>
    %c0_16 = arith.constant 0 : index
    %c0_17 = arith.constant 0 : index
    %26 = vector.load %arg5[%c0_16, %c0_17] : memref<4x32xf32, #tpu.memory_space<vmem>>, vector<4x32xf32>
    %cst_18 = arith.constant dense<0.000000e+00> : vector<1x32xf32>
    %27 = tpu.matmul %23, %26, %cst_18 {dimension_numbers = #tpu.dot_dimension_numbers<[1], [0], [0], [1], [0, 0, 1, 1], [], []>} : vector<1x4xf32>, vector<4x32xf32>, vector<1x32xf32> -> vector<1x32xf32>
    %28 = arith.subf %25, %27 : vector<1x32xf32>
    %29 = math.exp %28 : vector<1x32xf32>
    %cst_19 = arith.constant 1.000000e+00 : f32
    %30 = vector.broadcast %cst_19 : f32 to vector<1x32xf32>
    %31 = arith.addf %30, %29 : vector<1x32xf32>
    %cst_20 = arith.constant 1.000000e+00 : f32
    %32 = vector.broadcast %cst_20 : f32 to vector<1x32xf32>
    %33 = arith.divf %32, %31 : vector<1x32xf32>
    %34 = arith.subf %3, %1 : vector<256x32xf32>
    %35 = vector.broadcast %33 : vector<1x32xf32> to vector<256x32xf32>
    %36 = arith.mulf %35, %34 : vector<256x32xf32>
    %37 = arith.addf %1, %36 : vector<256x32xf32>
    %c0_21 = arith.constant 0 : index
    %c0_22 = arith.constant 0 : index
    %c0_23 = arith.constant 0 : index
    %38 = vector.load %arg6[%c0_21, %c0_22, %c0_23] : memref<1x256x32xf32, #tpu.memory_space<vmem>>, vector<1x256x32xf32>
    %39 = vector.shape_cast %38 : vector<1x256x32xf32> to vector<256x32xf32>
    %40 = vector.shape_cast %37 : vector<256x32xf32> to vector<1x256x32xf32>
    tpu.vector_store %arg6[%c0_21, %c0_22, %c0_23], %40 {strides = array<i32>} : memref<1x256x32xf32, #tpu.memory_space<vmem>>, vector<1x256x32xf32>,
    return
  }
  func.func @transform_0(%arg0: i32) -> (i32, i32, i32) {
    %c0_i32 = arith.constant 0 : i32
    %c0_i32_0 = arith.constant 0 : i32
    %c0_i32_1 = arith.constant 0 : i32
    return %arg0, %c0_i32, %c0_i32_0 : i32, i32, i32
  }
  func.func @transform_1(%arg0: i32) -> (i32, i32, i32) {
    %c0_i32 = arith.constant 0 : i32
    %c0_i32_0 = arith.constant 0 : i32
    %c0_i32_1 = arith.constant 0 : i32
    return %arg0, %c0_i32, %c0_i32_0 : i32, i32, i32
  }
  func.func @transform_2(%arg0: i32) -> (i32, i32) {
    %c0_i32 = arith.constant 0 : i32
    %c0_i32_0 = arith.constant 0 : i32
    %c0_i32_1 = arith.constant 0 : i32
    return %c0_i32, %c0_i32_0 : i32, i32
  }
  func.func @transform_3(%arg0: i32) -> (i32, i32) {
    %c0_i32 = arith.constant 0 : i32
    %c0_i32_0 = arith.constant 0 : i32
    %c0_i32_1 = arith.constant 0 : i32
    return %c0_i32, %c0_i32_0 : i32, i32
  }
  func.func @transform_4(%arg0: i32) -> (i32, i32) {
    %c0_i32 = arith.constant 0 : i32
    %c0_i32_0 = arith.constant 0 : i32
    %c0_i32_1 = arith.constant 0 : i32
    return %c0_i32, %c0_i32_0 : i32, i32
  }
  func.func @transform_5(%arg0: i32) -> (i32, i32, i32) {
    %c0_i32 = arith.constant 0 : i32
    %c0_i32_0 = arith.constant 0 : i32
    %c0_i32_1 = arith.constant 0 : i32
    return %arg0, %c0_i32, %c0_i32_0 : i32, i32, i32
  }
}

</mosaic_0001>

<llo_original>
// kernel: chx_forward.1
$region0: #{chx_forward.1}
  #allocation0 [shape = 'u32[]', space=smem, size = 0x4, offset = 0x4, fixed_abs, tag = 'smem constant byte address 0x4 - core index']
  #allocation1 [shape = 'u32[144,128]{1,0:T(1,128)}', space=vmem, size = 0x12000, scoped, tag = 'internal scratch']
  %s0 = inlined_call_operand.hbm [shape: f32[2,256,32], index: 0, kind: input, shape index: {}]
  %s1 = inlined_call_operand.hbm [shape: f32[2,256,32], index: 1, kind: input, shape index: {}]
  %s2 = inlined_call_operand.vmem [shape: f32[64,4], index: 2, kind: input, shape index: {}]
  %s3 = inlined_call_operand.vmem [shape: f32[4,32], index: 3, kind: input, shape index: {}]
  %s4 = inlined_call_operand.vmem [shape: f32[4,32], index: 4, kind: input, shape index: {}]
  %s5 = inlined_call_operand.hbm [shape: f32[2,256,32], index: 5, kind: output, shape index: {}]
  %s6 = sld [smem:[#allocation0]]
  $region61: #{chx_forward.1} parent=0
    _
  %s8 = ssub.s32 1, %s6
  %s9 = scalar_select 0, %s8, %s6
  $region1: #{chx_forward.1} parent=0
    #allocation2 [shape = 'u8[262144]{0}', space=vmem, size = 0x40000, scoped, tag = 'input window, operand 0']
    #allocation3 [shape = 's32[2]{0}', space=sflag, size = 0x8, scoped, tag = 'scoped memory for chx_forward.1']
    #allocation4 [shape = 's32[2]{0}', space=sflag, size = 0x8, scoped, tag = 'scoped memory for chx_forward.1']
    #allocation5 [shape = 'u8[262144]{0}', space=vmem, size = 0x40000, scoped, tag = 'input window, operand 1']
    #allocation6 [shape = 's32[2]{0}', space=sflag, size = 0x8, scoped, tag = 'scoped memory for chx_forward.1']
    #allocation7 [shape = 'u8[262144]{0}', space=vmem, size = 0x40000, scoped, tag = 'output window, operand 0']
    %10 = vsyncpa [#allocation3], 0
    %s11 = scalar_lea.sflag [#allocation3], 1
    %12 = vsyncpa %s11, 0
    %13 = vsyncpa [#allocation6], 0
    %s14 = scalar_lea.sflag [#allocation6], 1
    %15 = vsyncpa %s14, 0
    %16 = vsyncpa [#allocation4], 0
    %s17 = scalar_lea.sflag [#allocation4], 1
    %18 = vsyncpa %s17, 0
    loop: start=0, step=1, limit=4
    $region2: #{chx_forward.1} parent=1 // loop_pre_header
      _
    $region3: #{chx_forward.1} parent=1 // loop_header
      %s20 = sphi 0, %s24
      %p21 = scmp.ge.s32.totalorder %s20, 4
      %s30 = sphi 0, %s32
      %s33 = sphi 0, %s30
      %s34 = sphi 0, %s33
      %s50 = sphi 0, %s34
      %s56 = sphi 0, %s58
      %s59 = sphi 0, %s56
      %s60 = sphi 0, %s59
      %s76 = sphi 0, %s60
      %s80 = sphi 0, %s80
      %s82 = sphi 0, %s80
      %s83 = sphi 0, %s82
      %s97 = sphi 0, %s83
      %s101 = sphi 0, %s101
      %s103 = sphi 0, %s101
      %s104 = sphi 0, %s103
      %s118 = sphi 0, %s104
      %s122 = sphi 0, %s122
      %s124 = sphi 0, %s122
      %s125 = sphi 0, %s124
      %s139 = sphi 0, %s125
      %s145 = sphi 0, %s147
      %s148 = sphi 0, %s145
      %s149 = sphi 0, %s148
      %s165 = sphi 0, %s149
    $region4: #{chx_forward.1} parent=1 // loop_header_branch
      %23 = sbr.rel (%p21) target = $region8
    $region5: #{chx_forward.1} parent=1 // loop_body
      %s25 = ssub.s32 %s20, 1
      %s26 = ssub.s32 %s20, 2
      %s27 = sadd.s32 %s20, 1
      %s28 = ssub.s32 %s20, %s27
      %p29 = scmp.eq.s32.totalorder %s28, 0
      %s31 = sadd.s32 %s30, 1
      %s32 = scalar_select %p29, %s30, %s31
      %p35 = pneg %p29
      %p36 = scmp.eq.s32.totalorder %s20, 1
      %p37 = por %p35, %p36
      %p38 = scmp.ne.s32.totalorder %s30, %s33
      %p39 = scmp.eq.s32.totalorder %s20, 0
      %p40 = por %p38, %p39
      %p41 = scmp.ne.s32.totalorder %s30, %s33
      %p42 = scmp.eq.s32.totalorder %s25, 1
      %p43 = por %p41, %p42
      %p44 = scmp.ne.s32.totalorder %s33, %s34
      %p45 = scmp.eq.s32.totalorder %s25, 0
      %p46 = por %p44, %p45
      %p47 = scmp.ne.s32.totalorder %s33, %s34
      %p48 = scmp.eq.s32.totalorder %s26, 1
      %p49 = por %p47, %p48
      %p51 = scmp.ne.s32.totalorder %s34, %s50
      %p52 = scmp.eq.s32.totalorder %s26, 0
      %p53 = por %p51, %p52
      %s54 = ssub.s32 %s20, %s27
      %p55 = scmp.eq.s32.totalorder %s54, 0
      %s57 = sadd.s32 %s56, 1
      %s58 = scalar_select %p55, %s56, %s57
      %p61 = pneg %p55
      %p62 = scmp.eq.s32.totalorder %s20, 1
      %p63 = por %p61, %p62
      %p64 = scmp.ne.s32.totalorder %s56, %s59
      %p65 = scmp.eq.s32.totalorder %s20, 0
      %p66 = por %p64, %p65
      %p67 = scmp.ne.s32.totalorder %s56, %s59
      %p68 = scmp.eq.s32.totalorder %s25, 1
      %p69 = por %p67, %p68
      %p70 = scmp.ne.s32.totalorder %s59, %s60
      %p71 = scmp.eq.s32.totalorder %s25, 0
      %p72 = por %p70, %p71
      %p73 = scmp.ne.s32.totalorder %s59, %s60
      %p74 = scmp.eq.s32.totalorder %s26, 1
      %p75 = por %p73, %p74
      %p77 = scmp.ne.s32.totalorder %s60, %s76
      %p78 = scmp.eq.s32.totalorder %s26, 0
      %p79 = por %p77, %p78
      %s81 = sadd.s32 %s80, 1
      %p84 = scmp.eq.s32.totalorder %s20, 1
      %p85 = scmp.ne.s32.totalorder %s80, %s82
      %p86 = scmp.eq.s32.totalorder %s20, 0
      %p87 = por %p85, %p86
      %p88 = scmp.ne.s32.totalorder %s80, %s82
      %p89 = scmp.eq.s32.totalorder %s25, 1
      %p90 = por %p88, %p89
      %p91 = scmp.ne.s32.totalorder %s82, %s83
      %p92 = scmp.eq.s32.totalorder %s25, 0
      %p93 = por %p91, %p92
      %p94 = scmp.ne.s32.totalorder %s82, %s83
      %p95 = scmp.eq.s32.totalorder %s26, 1
      %p96 = por %p94, %p95
      %p98 = scmp.ne.s32.totalorder %s83, %s97
      %p99 = scmp.eq.s32.totalorder %s26, 0
      %p100 = por %p98, %p99
      %s102 = sadd.s32 %s101, 1
      %p105 = scmp.eq.s32.totalorder %s20, 1
      %p106 = scmp.ne.s32.totalorder %s101, %s103
      %p107 = scmp.eq.s32.totalorder %s20, 0
      %p108 = por %p106, %p107
      %p109 = scmp.ne.s32.totalorder %s101, %s103
      %p110 = scmp.eq.s32.totalorder %s25, 1
      %p111 = por %p109, %p110
      %p112 = scmp.ne.s32.totalorder %s103, %s104
      %p113 = scmp.eq.s32.totalorder %s25, 0
      %p114 = por %p112, %p113
      %p115 = scmp.ne.s32.totalorder %s103, %s104
      %p116 = scmp.eq.s32.totalorder %s26, 1
      %p117 = por %p115, %p116
      %p119 = scmp.ne.s32.totalorder %s104, %s118
      %p120 = scmp.eq.s32.totalorder %s26, 0
      %p121 = por %p119, %p120
      %s123 = sadd.s32 %s122, 1
      %p126 = scmp.eq.s32.totalorder %s20, 1
      %p127 = scmp.ne.s32.totalorder %s122, %s124
      %p128 = scmp.eq.s32.totalorder %s20, 0
      %p129 = por %p127, %p128
      %p130 = scmp.ne.s32.totalorder %s122, %s124
      %p131 = scmp.eq.s32.totalorder %s25, 1
      %p132 = por %p130, %p131
      %p133 = scmp.ne.s32.totalorder %s124, %s125
      %p134 = scmp.eq.s32.totalorder %s25, 0
      %p135 = por %p133, %p134
      %p136 = scmp.ne.s32.totalorder %s124, %s125
      %p137 = scmp.eq.s32.totalorder %s26, 1
      %p138 = por %p136, %p137
      %p140 = scmp.ne.s32.totalorder %s125, %s139
      %p141 = scmp.eq.s32.totalorder %s26, 0
      %p142 = por %p140, %p141
      %s143 = ssub.s32 %s20, %s27
      %p144 = scmp.eq.s32.totalorder %s143, 0
      %s146 = sadd.s32 %s145, 1
      %s147 = scalar_select %p144, %s145, %s146
      %p150 = pneg %p144
      %p151 = scmp.eq.s32.totalorder %s20, 1
      %p152 = por %p150, %p151
      %p153 = scmp.ne.s32.totalorder %s145, %s148
      %p154 = scmp.eq.s32.totalorder %s20, 0
      %p155 = por %p153, %p154
      %p156 = scmp.ne.s32.totalorder %s145, %s148
      %p157 = scmp.eq.s32.totalorder %s25, 1
      %p158 = por %p156, %p157
      %p159 = scmp.ne.s32.totalorder %s148, %s149
      %p160 = scmp.eq.s32.totalorder %s25, 0
      %p161 = por %p159, %p160
      %p162 = scmp.ne.s32.totalorder %s148, %s149
      %p163 = scmp.eq.s32.totalorder %s26, 1
      %p164 = por %p162, %p163
      %p166 = scmp.ne.s32.totalorder %s149, %s165
      %p167 = scmp.eq.s32.totalorder %s26, 0
      %p168 = por %p166, %p167
      %p169 = scmp.le.s32.totalorder 1, %s20
      %p170 = scmp.lt.s32.totalorder %s20, 3
      %p171 = pnand %p169, %p170
      %p172 = pneg %p171
      // Predicated region
      $region9: #{chx_forward.1} parent=5 // pred_check
        _
      $region10: #{chx_forward.1} parent=5 // pred_check_branch
        %174 = sbr.rel (%p171) target = $region12
      $region11: #{chx_forward.1} parent=5 // pred_region
        %s175 = ssub.s32 %s20, 1
        // Predicated region
        $region13: #{chx_forward.1} parent=11 // pred_check
          %p176 = pneg %p93
        $region14: #{chx_forward.1} parent=11 // pred_check_branch
          %178 = sbr.rel (%p176) target = $region16
        $region15: #{chx_forward.1} parent=11 // pred_region
          _
        $region16: #{chx_forward.1} parent=11 // pred_fallthru
          _
        // Predicated region
        $region17: #{chx_forward.1} parent=11 // pred_check
          %p179 = pneg %p114
        $region18: #{chx_forward.1} parent=11 // pred_check_branch
          %181 = sbr.rel (%p179) target = $region20
        $region19: #{chx_forward.1} parent=11 // pred_region
          _
        $region20: #{chx_forward.1} parent=11 // pred_fallthru
          _
        // Predicated region
        $region21: #{chx_forward.1} parent=11 // pred_check
          %p182 = pneg %p135
        $region22: #{chx_forward.1} parent=11 // pred_check_branch
          %184 = sbr.rel (%p182) target = $region24
        $region23: #{chx_forward.1} parent=11 // pred_region
          _
        $region24: #{chx_forward.1} parent=11 // pred_fallthru
          _
      $region12: #{chx_forward.1} parent=5 // pred_fallthru
        _
      %p185 = scmp.lt.s32.totalorder %s20, 2
      // Predicated region
      $region25: #{chx_forward.1} parent=5 // pred_check
        %p186 = pneg %p185
      $region26: #{chx_forward.1} parent=5 // pred_check_branch
        %188 = sbr.rel (%p186) target = $region28
      $region27: #{chx_forward.1} parent=5 // pred_region
        // Predicated region
        $region29: #{chx_forward.1} parent=27 // pred_check
          %p189 = pneg %p40
        $region30: #{chx_forward.1} parent=27 // pred_check_branch
          %191 = sbr.rel (%p189) target = $region32
        $region31: #{chx_forward.1} parent=27 // pred_region
          %s192 = sand.u32 %s30, 1
          %s193 = scalar_lea.sflag [#allocation3], %s192
          %s194 = sand.u32 %s30, 1
          %s195 = smul.addr %s194, 256
          %s196 = scalar_lea.vmem [#allocation2], %s195
          %s198 = ssub.s32 4096, 4096
          %199 = vsyncadd %s193, %s198
          %s200 = smul.addr %s20, 32
          %s201 = smul.addr %s200, 128
          %s202 = scalar_lea.hbm %s0, %s201
          %s203 = sshll.u32 %s196, 4
          %s204 = int_to_ptr.vmem [resolvable:$true] %s203
          %209 = dma.hbm_to_vmem [thread:$0]  %s202, 4096, %s204, %s193, 128, 128, 8
        $region32: #{chx_forward.1} parent=27 // pred_fallthru
          _
        // Predicated region
        $region33: #{chx_forward.1} parent=27 // pred_check
          %p210 = pneg %p66
        $region34: #{chx_forward.1} parent=27 // pred_check_branch
          %212 = sbr.rel (%p210) target = $region36
        $region35: #{chx_forward.1} parent=27 // pred_region
          %s213 = sand.u32 %s56, 1
          %s214 = scalar_lea.sflag [#allocation6], %s213
          %s215 = sand.u32 %s56, 1
          %s216 = smul.addr %s215, 256
          %s217 = scalar_lea.vmem [#allocation5], %s216
          %s219 = ssub.s32 4096, 4096
          %220 = vsyncadd %s214, %s219
          %s221 = smul.addr %s20, 32
          %s222 = smul.addr %s221, 128
          %s223 = scalar_lea.hbm %s1, %s222
          %s224 = sshll.u32 %s217, 4
          %s225 = int_to_ptr.vmem [resolvable:$true] %s224
          %230 = dma.hbm_to_vmem [thread:$0]  %s223, 4096, %s225, %s214, 128, 128, 8
        $region36: #{chx_forward.1} parent=27 // pred_fallthru
          _
      $region28: #{chx_forward.1} parent=5 // pred_fallthru
        _
      %p231 = scmp.le.s32.totalorder 1, %s20
      %p232 = scmp.lt.s32.totalorder %s20, 3
      %p233 = pnand %p231, %p232
      %p234 = pneg %p233
      // Predicated region
      $region37: #{chx_forward.1} parent=5 // pred_check
        _
      $region38: #{chx_forward.1} parent=5 // pred_check_branch
        %236 = sbr.rel (%p233) target = $region40
      $region39: #{chx_forward.1} parent=5 // pred_region
        %s237 = ssub.s32 %s20, 1
        %s238 = sand.u32 %s33, 1
        %s239 = scalar_lea.sflag [#allocation3], %s238
        %s240 = sand.u32 %s33, 1
        %s241 = smul.addr %s240, 256
        %s242 = scalar_lea.vmem [#allocation2], %s241
        // Predicated region
        $region41: #{chx_forward.1} parent=39 // pred_check
          %p243 = pneg %p46
        $region42: #{chx_forward.1} parent=39 // pred_check_branch
          %245 = sbr.rel (%p243) target = $region44
        $region43: #{chx_forward.1} parent=39 // pred_region
          %246 = dma.done %s239, 4096
        $region44: #{chx_forward.1} parent=39 // pred_fallthru
          _
        %s247 = sand.u32 %s59, 1
        %s248 = scalar_lea.sflag [#allocation6], %s247
        %s249 = sand.u32 %s59, 1
        %s250 = smul.addr %s249, 256
        %s251 = scalar_lea.vmem [#allocation5], %s250
        // Predicated region
        $region45: #{chx_forward.1} parent=39 // pred_check
          %p252 = pneg %p72
        $region46: #{chx_forward.1} parent=39 // pred_check_branch
          %254 = sbr.rel (%p252) target = $region48
        $region47: #{chx_forward.1} parent=39 // pred_region
          %255 = dma.done %s248, 4096
        $region48: #{chx_forward.1} parent=39 // pred_fallthru
          _
        %s256 = sand.u32 %s33, 1
        %s257 = scalar_lea.sflag [#allocation3], %s256
        %s258 = sand.u32 %s33, 1
        %s259 = smul.addr %s258, 256
        %s260 = scalar_lea.vmem [#allocation2], %s259
        %p261 = pneg %p46
        %p262 = pneg %p43
        %s263 = sand.u32 %s59, 1
        %s264 = scalar_lea.sflag [#allocation6], %s263
        %s265 = sand.u32 %s59, 1
        %s266 = smul.addr %s265, 256
        %s267 = scalar_lea.vmem [#allocation5], %s266
        %p268 = pneg %p72
        %p269 = pneg %p69
        %p270 = pneg %p93
        %p271 = pneg %p90
        %p272 = pneg %p114
        %p273 = pneg %p111
        %p274 = pneg %p135
        %p275 = pneg %p132
        %p276 = pneg %p161
        %p277 = pneg %p158
        %s278 = sand.u32 %s148, 1
        %s279 = scalar_lea.sflag [#allocation4], %s278
        %s280 = sand.u32 %s148, 1
        %s281 = smul.addr %s280, 256
        %s282 = scalar_lea.vmem [#allocation7], %s281
        %v283 = vld [vmem:[%s242] sm:$0xff]
        %v284 = vld [vmem:[%s242 + $0x8] sm:$0xff]
        %v285 = vld [vmem:[%s242 + $0x10] sm:$0xff]
        %v286 = vld [vmem:[%s242 + $0x18] sm:$0xff]
        %v287 = vld [vmem:[%s242 + $0x20] sm:$0xff]
        %v288 = vld [vmem:[%s242 + $0x28] sm:$0xff]
        %v289 = vld [vmem:[%s242 + $0x30] sm:$0xff]
        %v290 = vld [vmem:[%s242 + $0x38] sm:$0xff]
        %v291 = vld [vmem:[%s242 + $0x40] sm:$0xff]
        %v292 = vld [vmem:[%s242 + $0x48] sm:$0xff]
        %v293 = vld [vmem:[%s242 + $0x50] sm:$0xff]
        %v294 = vld [vmem:[%s242 + $0x58] sm:$0xff]
        %v295 = vld [vmem:[%s242 + $0x60] sm:$0xff]
        %v296 = vld [vmem:[%s242 + $0x68] sm:$0xff]
        %v297 = vld [vmem:[%s242 + $0x70] sm:$0xff]
        %v298 = vld [vmem:[%s242 + $0x78] sm:$0xff]
        %v299 = vld [vmem:[%s242 + $0x80] sm:$0xff]
        %v300 = vld [vmem:[%s242 + $0x88] sm:$0xff]
        %v301 = vld [vmem:[%s242 + $0x90] sm:$0xff]
        %v302 = vld [vmem:[%s242 + $0x98] sm:$0xff]
        %v303 = vld [vmem:[%s242 + $0xa0] sm:$0xff]
        %v304 = vld [vmem:[%s242 + $0xa8] sm:$0xff]
        %v305 = vld [vmem:[%s242 + $0xb0] sm:$0xff]
        %v306 = vld [vmem:[%s242 + $0xb8] sm:$0xff]
        %v307 = vld [vmem:[%s242 + $0xc0] sm:$0xff]
        %v308 = vld [vmem:[%s242 + $0xc8] sm:$0xff]
        %v309 = vld [vmem:[%s242 + $0xd0] sm:$0xff]
        %v310 = vld [vmem:[%s242 + $0xd8] sm:$0xff]
        %v311 = vld [vmem:[%s242 + $0xe0] sm:$0xff]
        %v312 = vld [vmem:[%s242 + $0xe8] sm:$0xff]
        %v313 = vld [vmem:[%s242 + $0xf0] sm:$0xff]
        %v314 = vld [vmem:[%s242 + $0xf8] sm:$0xff]
        %v315 = vld [vmem:[%s251] sm:$0xff]
        %v316 = vld [vmem:[%s251 + $0x8] sm:$0xff]
        %v317 = vld [vmem:[%s251 + $0x10] sm:$0xff]
        %v318 = vld [vmem:[%s251 + $0x18] sm:$0xff]
        %v319 = vld [vmem:[%s251 + $0x20] sm:$0xff]
        %v320 = vld [vmem:[%s251 + $0x28] sm:$0xff]
        %v321 = vld [vmem:[%s251 + $0x30] sm:$0xff]
        %v322 = vld [vmem:[%s251 + $0x38] sm:$0xff]
        %v323 = vld [vmem:[%s251 + $0x40] sm:$0xff]
        %v324 = vld [vmem:[%s251 + $0x48] sm:$0xff]
        %v325 = vld [vmem:[%s251 + $0x50] sm:$0xff]
        %v326 = vld [vmem:[%s251 + $0x58] sm:$0xff]
        %v327 = vld [vmem:[%s251 + $0x60] sm:$0xff]
        %v328 = vld [vmem:[%s251 + $0x68] sm:$0xff]
        %v329 = vld [vmem:[%s251 + $0x70] sm:$0xff]
        %v330 = vld [vmem:[%s251 + $0x78] sm:$0xff]
        %v331 = vld [vmem:[%s251 + $0x80] sm:$0xff]
        %v332 = vld [vmem:[%s251 + $0x88] sm:$0xff]
        %v333 = vld [vmem:[%s251 + $0x90] sm:$0xff]
        %v334 = vld [vmem:[%s251 + $0x98] sm:$0xff]
        %v335 = vld [vmem:[%s251 + $0xa0] sm:$0xff]
        %v336 = vld [vmem:[%s251 + $0xa8] sm:$0xff]
        %v337 = vld [vmem:[%s251 + $0xb0] sm:$0xff]
        %v338 = vld [vmem:[%s251 + $0xb8] sm:$0xff]
        %v339 = vld [vmem:[%s251 + $0xc0] sm:$0xff]
        %v340 = vld [vmem:[%s251 + $0xc8] sm:$0xff]
        %v341 = vld [vmem:[%s251 + $0xd0] sm:$0xff]
        %v342 = vld [vmem:[%s251 + $0xd8] sm:$0xff]
        %v343 = vld [vmem:[%s251 + $0xe0] sm:$0xff]
        %v344 = vld [vmem:[%s251 + $0xe8] sm:$0xff]
        %v345 = vld [vmem:[%s251 + $0xf0] sm:$0xff]
        %v346 = vld [vmem:[%s251 + $0xf8] sm:$0xff]
        %vm347 = vcmask 261120
        %v348 = vsel %vm347, %v283, 0.0
        %v349 = vsel %vm347, %v284, 0.0
        %v350 = vadd.f32 %v348, %v349
        %v351 = vsel %vm347, %v285, 0.0
        %v352 = vadd.f32 %v350, %v351
        %v353 = vsel %vm347, %v286, 0.0
        %v354 = vadd.f32 %v352, %v353
        %v355 = vsel %vm347, %v287, 0.0
        %v356 = vadd.f32 %v354, %v355
        %v357 = vsel %vm347, %v288, 0.0
        %v358 = vadd.f32 %v356, %v357
        %v359 = vsel %vm347, %v289, 0.0
        %v360 = vadd.f32 %v358, %v359
        %v361 = vsel %vm347, %v290, 0.0
        %v362 = vadd.f32 %v360, %v361
        %v363 = vsel %vm347, %v291, 0.0
        %v364 = vadd.f32 %v362, %v363
        %v365 = vsel %vm347, %v292, 0.0
        %v366 = vadd.f32 %v364, %v365
        %v367 = vsel %vm347, %v293, 0.0
        %v368 = vadd.f32 %v366, %v367
        %v369 = vsel %vm347, %v294, 0.0
        %v370 = vadd.f32 %v368, %v369
        %v371 = vsel %vm347, %v295, 0.0
        %v372 = vadd.f32 %v370, %v371
        %v373 = vsel %vm347, %v296, 0.0
        %v374 = vadd.f32 %v372, %v373
        %v375 = vsel %vm347, %v297, 0.0
        %v376 = vadd.f32 %v374, %v375
        %v377 = vsel %vm347, %v298, 0.0
        %v378 = vadd.f32 %v376, %v377
        %v379 = vsel %vm347, %v299, 0.0
        %v380 = vadd.f32 %v378, %v379
        %v381 = vsel %vm347, %v300, 0.0
        %v382 = vadd.f32 %v380, %v381
        %v383 = vsel %vm347, %v301, 0.0
        %v384 = vadd.f32 %v382, %v383
        %v385 = vsel %vm347, %v302, 0.0
        %v386 = vadd.f32 %v384, %v385
        %v387 = vsel %vm347, %v303, 0.0
        %v388 = vadd.f32 %v386, %v387
        %v389 = vsel %vm347, %v304, 0.0
        %v390 = vadd.f32 %v388, %v389
        %v391 = vsel %vm347, %v305, 0.0
        %v392 = vadd.f32 %v390, %v391
        %v393 = vsel %vm347, %v306, 0.0
        %v394 = vadd.f32 %v392, %v393
        %v395 = vsel %vm347, %v307, 0.0
        %v396 = vadd.f32 %v394, %v395
        %v397 = vsel %vm347, %v308, 0.0
        %v398 = vadd.f32 %v396, %v397
        %v399 = vsel %vm347, %v309, 0.0
        %v400 = vadd.f32 %v398, %v399
        %v401 = vsel %vm347, %v310, 0.0
        %v402 = vadd.f32 %v400, %v401
        %v403 = vsel %vm347, %v311, 0.0
        %v404 = vadd.f32 %v402, %v403
        %v405 = vsel %vm347, %v312, 0.0
        %v406 = vadd.f32 %v404, %v405
        %v407 = vsel %vm347, %v313, 0.0
        %v408 = vadd.f32 %v406, %v407
        %v409 = vsel %vm347, %v314, 0.0
        %v410 = vadd.f32 %v408, %v409
        %v411 = vrot.slane %v410, 4
        %v412 = vadd.f32 %v410, %v411
        %v413 = vrot.slane %v412, 2
        %v414 = vadd.f32 %v412, %v413
        %v415 = vrot.slane %v414, 1
        %v416 = vadd.f32 %v414, %v415
        %v417 = vsel %vm347, %v315, 0.0
        %v418 = vsel %vm347, %v316, 0.0
        %v419 = vadd.f32 %v417, %v418
        %v420 = vsel %vm347, %v317, 0.0
        %v421 = vadd.f32 %v419, %v420
        %v422 = vsel %vm347, %v318, 0.0
        %v423 = vadd.f32 %v421, %v422
        %v424 = vsel %vm347, %v319, 0.0
        %v425 = vadd.f32 %v423, %v424
        %v426 = vsel %vm347, %v320, 0.0
        %v427 = vadd.f32 %v425, %v426
        %v428 = vsel %vm347, %v321, 0.0
        %v429 = vadd.f32 %v427, %v428
        %v430 = vsel %vm347, %v322, 0.0
        %v431 = vadd.f32 %v429, %v430
        %v432 = vsel %vm347, %v323, 0.0
        %v433 = vadd.f32 %v431, %v432
        %v434 = vsel %vm347, %v324, 0.0
        %v435 = vadd.f32 %v433, %v434
        %v436 = vsel %vm347, %v325, 0.0
        %v437 = vadd.f32 %v435, %v436
        %v438 = vsel %vm347, %v326, 0.0
        %v439 = vadd.f32 %v437, %v438
        %v440 = vsel %vm347, %v327, 0.0
        %v441 = vadd.f32 %v439, %v440
        %v442 = vsel %vm347, %v328, 0.0
        %v443 = vadd.f32 %v441, %v442
        %v444 = vsel %vm347, %v329, 0.0
        %v445 = vadd.f32 %v443, %v444
        %v446 = vsel %vm347, %v330, 0.0
        %v447 = vadd.f32 %v445, %v446
        %v448 = vsel %vm347, %v331, 0.0
        %v449 = vadd.f32 %v447, %v448
        %v450 = vsel %vm347, %v332, 0.0
        %v451 = vadd.f32 %v449, %v450
        %v452 = vsel %vm347, %v333, 0.0
        %v453 = vadd.f32 %v451, %v452
        %v454 = vsel %vm347, %v334, 0.0
        %v455 = vadd.f32 %v453, %v454
        %v456 = vsel %vm347, %v335, 0.0
        %v457 = vadd.f32 %v455, %v456
        %v458 = vsel %vm347, %v336, 0.0
        %v459 = vadd.f32 %v457, %v458
        %v460 = vsel %vm347, %v337, 0.0
        %v461 = vadd.f32 %v459, %v460
        %v462 = vsel %vm347, %v338, 0.0
        %v463 = vadd.f32 %v461, %v462
        %v464 = vsel %vm347, %v339, 0.0
        %v465 = vadd.f32 %v463, %v464
        %v466 = vsel %vm347, %v340, 0.0
        %v467 = vadd.f32 %v465, %v466
        %v468 = vsel %vm347, %v341, 0.0
        %v469 = vadd.f32 %v467, %v468
        %v470 = vsel %vm347, %v342, 0.0
        %v471 = vadd.f32 %v469, %v470
        %v472 = vsel %vm347, %v343, 0.0
        %v473 = vadd.f32 %v471, %v472
        %v474 = vsel %vm347, %v344, 0.0
        %v475 = vadd.f32 %v473, %v474
        %v476 = vsel %vm347, %v345, 0.0
        %v477 = vadd.f32 %v475, %v476
        %v478 = vsel %vm347, %v346, 0.0
        %v479 = vadd.f32 %v477, %v478
        %v480 = vrot.slane %v479, 4
        %v481 = vadd.f32 %v479, %v480
        %v482 = vrot.slane %v481, 2
        %v483 = vadd.f32 %v481, %v482
        %v484 = vrot.slane %v483, 1
        %v485 = vadd.f32 %v483, %v484
        %v486 = vsel %vm347, %v283, -inf
        %v487 = vsel %vm347, %v284, -inf
        %v488 = vsel %vm347, %v285, -inf
        %v489 = vsel %vm347, %v286, -inf
        %v490 = vsel %vm347, %v287, -inf
        %v491 = vmax.f32 %v486, %v490
        %v492 = vsel %vm347, %v288, -inf
        %v493 = vmax.f32 %v487, %v492
        %v494 = vsel %vm347, %v289, -inf
        %v495 = vmax.f32 %v488, %v494
        %v496 = vsel %vm347, %v290, -inf
        %v497 = vmax.f32 %v489, %v496
        %v498 = vsel %vm347, %v291, -inf
        %v499 = vmax.f32 %v491, %v498
        %v500 = vsel %vm347, %v292, -inf
        %v501 = vmax.f32 %v493, %v500
        %v502 = vsel %vm347, %v293, -inf
        %v503 = vmax.f32 %v495, %v502
        %v504 = vsel %vm347, %v294, -inf
        %v505 = vmax.f32 %v497, %v504
        %v506 = vsel %vm347, %v295, -inf
        %v507 = vmax.f32 %v499, %v506
        %v508 = vsel %vm347, %v296, -inf
        %v509 = vmax.f32 %v501, %v508
        %v510 = vsel %vm347, %v297, -inf
        %v511 = vmax.f32 %v503, %v510
        %v512 = vsel %vm347, %v298, -inf
        %v513 = vmax.f32 %v505, %v512
        %v514 = vsel %vm347, %v299, -inf
        %v515 = vmax.f32 %v507, %v514
        %v516 = vsel %vm347, %v300, -inf
        %v517 = vmax.f32 %v509, %v516
        %v518 = vsel %vm347, %v301, -inf
        %v519 = vmax.f32 %v511, %v518
        %v520 = vsel %vm347, %v302, -inf
        %v521 = vmax.f32 %v513, %v520
        %v522 = vsel %vm347, %v303, -inf
        %v523 = vmax.f32 %v515, %v522
        %v524 = vsel %vm347, %v304, -inf
        %v525 = vmax.f32 %v517, %v524
        %v526 = vsel %vm347, %v305, -inf
        %v527 = vmax.f32 %v519, %v526
        %v528 = vsel %vm347, %v306, -inf
        %v529 = vmax.f32 %v521, %v528
        %v530 = vsel %vm347, %v307, -inf
        %v531 = vmax.f32 %v523, %v530
        %v532 = vsel %vm347, %v308, -inf
        %v533 = vmax.f32 %v525, %v532
        %v534 = vsel %vm347, %v309, -inf
        %v535 = vmax.f32 %v527, %v534
        %v536 = vsel %vm347, %v310, -inf
        %v537 = vmax.f32 %v529, %v536
        %v538 = vsel %vm347, %v311, -inf
        %v539 = vmax.f32 %v531, %v538
        %v540 = vsel %vm347, %v312, -inf
        %v541 = vmax.f32 %v533, %v540
        %v542 = vsel %vm347, %v313, -inf
        %v543 = vmax.f32 %v535, %v542
        %v544 = vsel %vm347, %v314, -inf
        %v545 = vmax.f32 %v537, %v544
        %v546 = vmax.f32 %v539, %v541
        %v547 = vmax.f32 %v543, %v545
        %v548 = vmax.f32 %v546, %v547
        %v549 = vrot.slane %v548, 4
        %v550 = vmax.f32 %v548, %v549
        %v551 = vrot.slane %v550, 2
        %v552 = vmax.f32 %v550, %v551
        %v553 = vrot.slane %v552, 1
        %v554 = vmax.f32 %v552, %v553
        %v555 = vsel %vm347, %v315, -inf
        %v556 = vsel %vm347, %v316, -inf
        %v557 = vsel %vm347, %v317, -inf
        %v558 = vsel %vm347, %v318, -inf
        %v559 = vsel %vm347, %v319, -inf
        %v560 = vmax.f32 %v555, %v559
        %v561 = vsel %vm347, %v320, -inf
        %v562 = vmax.f32 %v556, %v561
        %v563 = vsel %vm347, %v321, -inf
        %v564 = vmax.f32 %v557, %v563
        %v565 = vsel %vm347, %v322, -inf
        %v566 = vmax.f32 %v558, %v565
        %v567 = vsel %vm347, %v323, -inf
        %v568 = vmax.f32 %v560, %v567
        %v569 = vsel %vm347, %v324, -inf
        %v570 = vmax.f32 %v562, %v569
        %v571 = vsel %vm347, %v325, -inf
        %v572 = vmax.f32 %v564, %v571
        %v573 = vsel %vm347, %v326, -inf
        %v574 = vmax.f32 %v566, %v573
        %v575 = vsel %vm347, %v327, -inf
        %v576 = vmax.f32 %v568, %v575
        %v577 = vsel %vm347, %v328, -inf
        %v578 = vmax.f32 %v570, %v577
        %v579 = vsel %vm347, %v329, -inf
        %v580 = vmax.f32 %v572, %v579
        %v581 = vsel %vm347, %v330, -inf
        %v582 = vmax.f32 %v574, %v581
        %v583 = vsel %vm347, %v331, -inf
        %v584 = vmax.f32 %v576, %v583
        %v585 = vsel %vm347, %v332, -inf
        %v586 = vmax.f32 %v578, %v585
        %v587 = vsel %vm347, %v333, -inf
        %v588 = vmax.f32 %v580, %v587
        %v589 = vsel %vm347, %v334, -inf
        %v590 = vmax.f32 %v582, %v589
        %v591 = vsel %vm347, %v335, -inf
        %v592 = vmax.f32 %v584, %v591
        %v593 = vsel %vm347, %v336, -inf
        %v594 = vmax.f32 %v586, %v593
        %v595 = vsel %vm347, %v337, -inf
        %v596 = vmax.f32 %v588, %v595
        %v597 = vsel %vm347, %v338, -inf
        %v598 = vmax.f32 %v590, %v597
        %v599 = vsel %vm347, %v339, -inf
        %v600 = vmax.f32 %v592, %v599
        %v601 = vsel %vm347, %v340, -inf
        %v602 = vmax.f32 %v594, %v601
        %v603 = vsel %vm347, %v341, -inf
        %v604 = vmax.f32 %v596, %v603
        %v605 = vsel %vm347, %v342, -inf
        %v606 = vmax.f32 %v598, %v605
        %v607 = vsel %vm347, %v343, -inf
        %v608 = vmax.f32 %v600, %v607
        %v609 = vsel %vm347, %v344, -inf
        %v610 = vmax.f32 %v602, %v609
        %v611 = vsel %vm347, %v345, -inf
        %v612 = vmax.f32 %v604, %v611
        %v613 = vsel %vm347, %v346, -inf
        %v614 = vmax.f32 %v606, %v613
        %v615 = vmax.f32 %v608, %v610
        %v616 = vmax.f32 %v612, %v614
        %v617 = vmax.f32 %v615, %v616
        %v618 = vrot.slane %v617, 4
        %v619 = vmax.f32 %v617, %v618
        %v620 = vrot.slane %v619, 2
        %v621 = vmax.f32 %v619, %v620
        %v622 = vrot.slane %v621, 1
        %v623 = vmax.f32 %v621, %v622
        %625 = vrot.lane.b32.xlu0 %v485, 32
        %v626 = vpop.permute.xlu0 %625
        %v628 = vsel %vm347, %v416, %v626
        %v629 = vmul.f32 %v628, 0.00390625
        %631 = vrot.lane.b32.xlu0 %v623, 32
        %v632 = vpop.permute.xlu0 %631
        %v634 = vsel %vm347, %v554, %v632
        %v636 = vrot.slane %v634, 7
        %vm638 = vcmask 1040384
        %v639 = vsel %vm638, %v629, %v636
        %v640 = vld [vmem:[%s2] sm:$0xff]
        %v641 = vld [vmem:[%s2 + $0x8] sm:$0xff]
        %v642 = vld [vmem:[%s2 + $0x10] sm:$0xff]
        %v643 = vld [vmem:[%s2 + $0x18] sm:$0xff]
        %v644 = vld [vmem:[%s2 + $0x20] sm:$0xff]
        %v645 = vld [vmem:[%s2 + $0x28] sm:$0xff]
        %v646 = vld [vmem:[%s2 + $0x30] sm:$0xff]
        %v647 = vld [vmem:[%s2 + $0x38] sm:$0xff]
        %vm648 = vcmask 523264
        %v650 = vsel %vm648, %v639, 0
        %652 = vmatprep.subr.mxu0 0.0
        %653 = vmatpush1.msra.mxu0 %v640
        %654 = vmatprep.subr.mxu0 0.0
        %655 = vmatpush1.msra.mxu0 %v641
        %656 = vmatprep.subr.mxu0 0.0
        %657 = vmatpush1.msra.mxu0 %v642
        %658 = vmatprep.subr.mxu0 0.0
        %659 = vmatpush1.msra.mxu0 %v643
        %660 = vmatprep.subr.mxu0 0.0
        %661 = vmatpush1.msra.mxu0 %v644
        %662 = vmatprep.subr.mxu0 0.0
        %663 = vmatpush1.msra.mxu0 %v645
        %664 = vmatprep.subr.mxu0 0.0
        %665 = vmatpush1.msra.mxu0 %v646
        %666 = vmatprep.subr.mxu0 0.0
        %667 = vmatpush1.msra.mxu0 %v647
        %668 = vmatprep.subr.mxu0 0.0
        %669 = vmatpush1.msra.mxu0 0.0
        %670 = vmatprep.subr.mxu0 0.0
        %671 = vmatpush1.msra.mxu0 0.0
        %672 = vmatprep.subr.mxu0 0.0
        %673 = vmatpush1.msra.mxu0 0.0
        %674 = vmatprep.subr.mxu0 0.0
        %675 = vmatpush1.msra.mxu0 0.0
        %676 = vmatprep.subr.mxu0 0.0
        %677 = vmatpush1.msra.mxu0 0.0
        %678 = vmatprep.subr.mxu0 0.0
        %679 = vmatpush1.msra.mxu0 0.0
        %680 = vmatprep.subr.mxu0 0.0
        %681 = vmatpush1.msra.mxu0 0.0
        %682 = vmatprep.subr.mxu0 0.0
        %683 = vmatpush1.msra.mxu0 0.0
        %684 = vmatprep.subr.mxu0 0.0
        %685 = vmatpush1.msra.mxu0 0.0
        %686 = vmatprep.subr.mxu0 0.0
        %687 = vmatpush1.msra.mxu0 0.0
        %688 = vmatprep.subr.mxu0 0.0
        %689 = vmatpush1.msra.mxu0 0.0
        %690 = vmatprep.subr.mxu0 0.0
        %691 = vmatpush1.msra.mxu0 0.0
        %692 = vmatprep.subr.mxu0 0.0
        %693 = vmatpush1.msra.mxu0 0.0
        %694 = vmatprep.subr.mxu0 0.0
        %695 = vmatpush1.msra.mxu0 0.0
        %696 = vmatprep.subr.mxu0 0.0
        %697 = vmatpush1.msra.mxu0 0.0
        %698 = vmatprep.subr.mxu0 0.0
        %699 = vmatpush1.msra.mxu0 0.0
        %700 = vmatprep.subr.mxu0 0.0
        %701 = vmatpush1.msra.mxu0 0.0
        %702 = vmatprep.subr.mxu0 0.0
        %703 = vmatpush1.msra.mxu0 0.0
        %704 = vmatprep.subr.mxu0 0.0
        %705 = vmatpush1.msra.mxu0 0.0
        %706 = vmatprep.subr.mxu0 0.0
        %707 = vmatpush1.msra.mxu0 0.0
        %708 = vmatprep.subr.mxu0 0.0
        %709 = vmatpush1.msra.mxu0 0.0
        %710 = vmatprep.subr.mxu0 0.0
        %711 = vmatpush1.msra.mxu0 0.0
        %712 = vmatprep.subr.mxu0 0.0
        %713 = vmatpush1.msra.mxu0 0.0
        %714 = vmatprep.subr.mxu0 0.0
        %715 = vmatpush1.msra.mxu0 0.0
        %716 = vmatprep.mubr.f32.mxu0 0.0
        %717 = vmatmul.mubr.f32.gmra.mrb[0].mxu0 %v650
        %v718 = vpop.f32.mrb[0].mxu0
        %v719 = vadd.f32 0.0, %v718
        %v720 = vpop.f32.mrb[0].mxu0
        %721 = vdwg.mxu0
        %v722 = vmax.f32 %v719, 0.0
        %v724 = vrot.slane %v722, 1
        %v726 = vadd.f32 %v722, %v724
        %v727 = vld [vmem:[%s3] sm:$0xf]
        %vm728 = vcmask 31744
        %v730 = vsel %vm728, %v726, 0
        %vm732 = vcmask 1043456
        %v734 = vsel %vm732, %v727, 0
        %736 = vmatprep.subr.mxu0 0.0
        %737 = vmatpush1.msra.mxu0 %v734
        %738 = vmatprep.subr.mxu0 0.0
        %739 = vmatpush1.msra.mxu0 0.0
        %740 = vmatprep.subr.mxu0 0.0
        %741 = vmatpush1.msra.mxu0 0.0
        %742 = vmatprep.subr.mxu0 0.0
        %743 = vmatpush1.msra.mxu0 0.0
        %744 = vmatprep.subr.mxu0 0.0
        %745 = vmatpush1.msra.mxu0 0.0
        %746 = vmatprep.subr.mxu0 0.0
        %747 = vmatpush1.msra.mxu0 0.0
        %748 = vmatprep.subr.mxu0 0.0
        %749 = vmatpush1.msra.mxu0 0.0
        %750 = vmatprep.subr.mxu0 0.0
        %751 = vmatpush1.msra.mxu0 0.0
        %752 = vmatprep.subr.mxu0 0.0
        %753 = vmatpush1.msra.mxu0 0.0
        %754 = vmatprep.subr.mxu0 0.0
        %755 = vmatpush1.msra.mxu0 0.0
        %756 = vmatprep.subr.mxu0 0.0
        %757 = vmatpush1.msra.mxu0 0.0
        %758 = vmatprep.subr.mxu0 0.0
        %759 = vmatpush1.msra.mxu0 0.0
        %760 = vmatprep.subr.mxu0 0.0
        %761 = vmatpush1.msra.mxu0 0.0
        %762 = vmatprep.subr.mxu0 0.0
        %763 = vmatpush1.msra.mxu0 0.0
        %764 = vmatprep.subr.mxu0 0.0
        %765 = vmatpush1.msra.mxu0 0.0
        %766 = vmatprep.subr.mxu0 0.0
        %767 = vmatpush1.msra.mxu0 0.0
        %768 = vmatprep.subr.mxu0 0.0
        %769 = vmatpush1.msra.mxu0 0.0
        %770 = vmatprep.subr.mxu0 0.0
        %771 = vmatpush1.msra.mxu0 0.0
        %772 = vmatprep.subr.mxu0 0.0
        %773 = vmatpush1.msra.mxu0 0.0
        %774 = vmatprep.subr.mxu0 0.0
        %775 = vmatpush1.msra.mxu0 0.0
        %776 = vmatprep.subr.mxu0 0.0
        %777 = vmatpush1.msra.mxu0 0.0
        %778 = vmatprep.subr.mxu0 0.0
        %779 = vmatpush1.msra.mxu0 0.0
        %780 = vmatprep.subr.mxu0 0.0
        %781 = vmatpush1.msra.mxu0 0.0
        %782 = vmatprep.subr.mxu0 0.0
        %783 = vmatpush1.msra.mxu0 0.0
        %784 = vmatprep.subr.mxu0 0.0
        %785 = vmatpush1.msra.mxu0 0.0
        %786 = vmatprep.subr.mxu0 0.0
        %787 = vmatpush1.msra.mxu0 0.0
        %788 = vmatprep.subr.mxu0 0.0
        %789 = vmatpush1.msra.mxu0 0.0
        %790 = vmatprep.subr.mxu0 0.0
        %791 = vmatpush1.msra.mxu0 0.0
        %792 = vmatprep.subr.mxu0 0.0
        %793 = vmatpush1.msra.mxu0 0.0
        %794 = vmatprep.subr.mxu0 0.0
        %795 = vmatpush1.msra.mxu0 0.0
        %796 = vmatprep.subr.mxu0 0.0
        %797 = vmatpush1.msra.mxu0 0.0
        %798 = vmatprep.subr.mxu0 0.0
        %799 = vmatpush1.msra.mxu0 0.0
        %800 = vmatprep.mubr.f32.mxu0 0.0
        %801 = vmatmul.mubr.f32.gmra.mrb[0].mxu0 %v730
        %v802 = vpop.f32.mrb[0].mxu0
        %v803 = vadd.f32 0.0, %v802
        %v804 = vpop.f32.mrb[0].mxu0
        %805 = vdwg.mxu0
        %v806 = vld [vmem:[%s4] sm:$0xf]
        %v808 = vsel %vm732, %v806, 0
        %810 = vmatprep.subr.mxu0 0.0
        %811 = vmatpush1.msra.mxu0 %v808
        %812 = vmatprep.subr.mxu0 0.0
        %813 = vmatpush1.msra.mxu0 0.0
        %814 = vmatprep.subr.mxu0 0.0
        %815 = vmatpush1.msra.mxu0 0.0
        %816 = vmatprep.subr.mxu0 0.0
        %817 = vmatpush1.msra.mxu0 0.0
        %818 = vmatprep.subr.mxu0 0.0
        %819 = vmatpush1.msra.mxu0 0.0
        %820 = vmatprep.subr.mxu0 0.0
        %821 = vmatpush1.msra.mxu0 0.0
        %822 = vmatprep.subr.mxu0 0.0
        %823 = vmatpush1.msra.mxu0 0.0
        %824 = vmatprep.subr.mxu0 0.0
        %825 = vmatpush1.msra.mxu0 0.0
        %826 = vmatprep.subr.mxu0 0.0
        %827 = vmatpush1.msra.mxu0 0.0
        %828 = vmatprep.subr.mxu0 0.0
        %829 = vmatpush1.msra.mxu0 0.0
        %830 = vmatprep.subr.mxu0 0.0
        %831 = vmatpush1.msra.mxu0 0.0
        %832 = vmatprep.subr.mxu0 0.0
        %833 = vmatpush1.msra.mxu0 0.0
        %834 = vmatprep.subr.mxu0 0.0
        %835 = vmatpush1.msra.mxu0 0.0
        %836 = vmatprep.subr.mxu0 0.0
        %837 = vmatpush1.msra.mxu0 0.0
        %838 = vmatprep.subr.mxu0 0.0
        %839 = vmatpush1.msra.mxu0 0.0
        %840 = vmatprep.subr.mxu0 0.0
        %841 = vmatpush1.msra.mxu0 0.0
        %842 = vmatprep.subr.mxu0 0.0
        %843 = vmatpush1.msra.mxu0 0.0
        %844 = vmatprep.subr.mxu0 0.0
        %845 = vmatpush1.msra.mxu0 0.0
        %846 = vmatprep.subr.mxu0 0.0
        %847 = vmatpush1.msra.mxu0 0.0
        %848 = vmatprep.subr.mxu0 0.0
        %849 = vmatpush1.msra.mxu0 0.0
        %850 = vmatprep.subr.mxu0 0.0
        %851 = vmatpush1.msra.mxu0 0.0
        %852 = vmatprep.subr.mxu0 0.0
        %853 = vmatpush1.msra.mxu0 0.0
        %854 = vmatprep.subr.mxu0 0.0
        %855 = vmatpush1.msra.mxu0 0.0
        %856 = vmatprep.subr.mxu0 0.0
        %857 = vmatpush1.msra.mxu0 0.0
        %858 = vmatprep.subr.mxu0 0.0
        %859 = vmatpush1.msra.mxu0 0.0
        %860 = vmatprep.subr.mxu0 0.0
        %861 = vmatpush1.msra.mxu0 0.0
        %862 = vmatprep.subr.mxu0 0.0
        %863 = vmatpush1.msra.mxu0 0.0
        %864 = vmatprep.subr.mxu0 0.0
        %865 = vmatpush1.msra.mxu0 0.0
        %866 = vmatprep.subr.mxu0 0.0
        %867 = vmatpush1.msra.mxu0 0.0
        %868 = vmatprep.subr.mxu0 0.0
        %869 = vmatpush1.msra.mxu0 0.0
        %870 = vmatprep.subr.mxu0 0.0
        %871 = vmatpush1.msra.mxu0 0.0
        %872 = vmatprep.subr.mxu0 0.0
        %873 = vmatpush1.msra.mxu0 0.0
        %874 = vmatprep.mubr.f32.mxu0 0.0
        %875 = vmatmul.mubr.f32.gmra.mrb[0].mxu0 %v730
        %v876 = vpop.f32.mrb[0].mxu0
        %v877 = vadd.f32 0.0, %v876
        %v878 = vpop.f32.mrb[0].mxu0
        %879 = vdwg.mxu0
        %v880 = vsub.f32 %v803, %v877
        %v881 = vmul.f32 %v880, 1.442695
        %v882 = vpow.pop %v881
        %v883 = vadd.f32 %v882, 1.0
        %v884 = vrcp.pop %v883
        %v885 = vmul.f32 1.0, %v884
        %v886 = vsub.f32 %v315, %v283
        %v887 = vsub.f32 %v316, %v284
        %v888 = vsub.f32 %v317, %v285
        %v889 = vsub.f32 %v318, %v286
        %v890 = vsub.f32 %v319, %v287
        %v891 = vsub.f32 %v320, %v288
        %v892 = vsub.f32 %v321, %v289
        %v893 = vsub.f32 %v322, %v290
        %v894 = vsub.f32 %v323, %v291
        %v895 = vsub.f32 %v324, %v292
        %v896 = vsub.f32 %v325, %v293
        %v897 = vsub.f32 %v326, %v294
        %v898 = vsub.f32 %v327, %v295
        %v899 = vsub.f32 %v328, %v296
        %v900 = vsub.f32 %v329, %v297
        %v901 = vsub.f32 %v330, %v298
        %v902 = vsub.f32 %v331, %v299
        %v903 = vsub.f32 %v332, %v300
        %v904 = vsub.f32 %v333, %v301
        %v905 = vsub.f32 %v334, %v302
        %v906 = vsub.f32 %v335, %v303
        %v907 = vsub.f32 %v336, %v304
        %v908 = vsub.f32 %v337, %v305
        %v909 = vsub.f32 %v338, %v306
        %v910 = vsub.f32 %v339, %v307
        %v911 = vsub.f32 %v340, %v308
        %v912 = vsub.f32 %v341, %v309
        %v913 = vsub.f32 %v342, %v310
        %v914 = vsub.f32 %v343, %v311
        %v915 = vsub.f32 %v344, %v312
        %v916 = vsub.f32 %v345, %v313
        %v917 = vsub.f32 %v346, %v314
        %v918 = vlaneseq
        %v919 = vshrl.u32 %v918, 7
        %v920 = vsub.s32 0, %v919
        %v921 = vrot.slane %v885, %v920
        %v922 = vmul.f32 %v921, %v886
        %v923 = vmul.f32 %v921, %v887
        %v924 = vmul.f32 %v921, %v888
        %v925 = vmul.f32 %v921, %v889
        %v926 = vmul.f32 %v921, %v890
        %v927 = vmul.f32 %v921, %v891
        %v928 = vmul.f32 %v921, %v892
        %v929 = vmul.f32 %v921, %v893
        %v930 = vmul.f32 %v921, %v894
        %v931 = vmul.f32 %v921, %v895
        %v932 = vmul.f32 %v921, %v896
        %v933 = vmul.f32 %v921, %v897
        %v934 = vmul.f32 %v921, %v898
        %v935 = vmul.f32 %v921, %v899
        %v936 = vmul.f32 %v921, %v900
        %v937 = vmul.f32 %v921, %v901
        %v938 = vmul.f32 %v921, %v902
        %v939 = vmul.f32 %v921, %v903
        %v940 = vmul.f32 %v921, %v904
        %v941 = vmul.f32 %v921, %v905
        %v942 = vmul.f32 %v921, %v906
        %v943 = vmul.f32 %v921, %v907
        %v944 = vmul.f32 %v921, %v908
        %v945 = vmul.f32 %v921, %v909
        %v946 = vmul.f32 %v921, %v910
        %v947 = vmul.f32 %v921, %v911
        %v948 = vmul.f32 %v921, %v912
        %v949 = vmul.f32 %v921, %v913
        %v950 = vmul.f32 %v921, %v914
        %v951 = vmul.f32 %v921, %v915
        %v952 = vmul.f32 %v921, %v916
        %v953 = vmul.f32 %v921, %v917
        %v954 = vadd.f32 %v283, %v922
        %v955 = vadd.f32 %v284, %v923
        %v956 = vadd.f32 %v285, %v924
        %v957 = vadd.f32 %v286, %v925
        %v958 = vadd.f32 %v287, %v926
        %v959 = vadd.f32 %v288, %v927
        %v960 = vadd.f32 %v289, %v928
        %v961 = vadd.f32 %v290, %v929
        %v962 = vadd.f32 %v291, %v930
        %v963 = vadd.f32 %v292, %v931
        %v964 = vadd.f32 %v293, %v932
        %v965 = vadd.f32 %v294, %v933
        %v966 = vadd.f32 %v295, %v934
        %v967 = vadd.f32 %v296, %v935
        %v968 = vadd.f32 %v297, %v936
        %v969 = vadd.f32 %v298, %v937
        %v970 = vadd.f32 %v299, %v938
        %v971 = vadd.f32 %v300, %v939
        %v972 = vadd.f32 %v301, %v940
        %v973 = vadd.f32 %v302, %v941
        %v974 = vadd.f32 %v303, %v942
        %v975 = vadd.f32 %v304, %v943
        %v976 = vadd.f32 %v305, %v944
        %v977 = vadd.f32 %v306, %v945
        %v978 = vadd.f32 %v307, %v946
        %v979 = vadd.f32 %v308, %v947
        %v980 = vadd.f32 %v309, %v948
        %v981 = vadd.f32 %v310, %v949
        %v982 = vadd.f32 %v311, %v950
        %v983 = vadd.f32 %v312, %v951
        %v984 = vadd.f32 %v313, %v952
        %v985 = vadd.f32 %v314, %v953
        %986 = vst.msk [vmem:[%s282] sm:$0xff] %vm347, %v954
        %987 = vst.msk [vmem:[%s282 + $0x8] sm:$0xff] %vm347, %v955
        %988 = vst.msk [vmem:[%s282 + $0x10] sm:$0xff] %vm347, %v956
        %989 = vst.msk [vmem:[%s282 + $0x18] sm:$0xff] %vm347, %v957
        %990 = vst.msk [vmem:[%s282 + $0x20] sm:$0xff] %vm347, %v958
        %991 = vst.msk [vmem:[%s282 + $0x28] sm:$0xff] %vm347, %v959
        %992 = vst.msk [vmem:[%s282 + $0x30] sm:$0xff] %vm347, %v960
        %993 = vst.msk [vmem:[%s282 + $0x38] sm:$0xff] %vm347, %v961
        %994 = vst.msk [vmem:[%s282 + $0x40] sm:$0xff] %vm347, %v962
        %995 = vst.msk [vmem:[%s282 + $0x48] sm:$0xff] %vm347, %v963
        %996 = vst.msk [vmem:[%s282 + $0x50] sm:$0xff] %vm347, %v964
        %997 = vst.msk [vmem:[%s282 + $0x58] sm:$0xff] %vm347, %v965
        %998 = vst.msk [vmem:[%s282 + $0x60] sm:$0xff] %vm347, %v966
        %999 = vst.msk [vmem:[%s282 + $0x68] sm:$0xff] %vm347, %v967
        %1000 = vst.msk [vmem:[%s282 + $0x70] sm:$0xff] %vm347, %v968
        %1001 = vst.msk [vmem:[%s282 + $0x78] sm:$0xff] %vm347, %v969
        %1002 = vst.msk [vmem:[%s282 + $0x80] sm:$0xff] %vm347, %v970
        %1003 = vst.msk [vmem:[%s282 + $0x88] sm:$0xff] %vm347, %v971
        %1004 = vst.msk [vmem:[%s282 + $0x90] sm:$0xff] %vm347, %v972
        %1005 = vst.msk [vmem:[%s282 + $0x98] sm:$0xff] %vm347, %v973
        %1006 = vst.msk [vmem:[%s282 + $0xa0] sm:$0xff] %vm347, %v974
        %1007 = vst.msk [vmem:[%s282 + $0xa8] sm:$0xff] %vm347, %v975
        %1008 = vst.msk [vmem:[%s282 + $0xb0] sm:$0xff] %vm347, %v976
        %1009 = vst.msk [vmem:[%s282 + $0xb8] sm:$0xff] %vm347, %v977
        %1010 = vst.msk [vmem:[%s282 + $0xc0] sm:$0xff] %vm347, %v978
        %1011 = vst.msk [vmem:[%s282 + $0xc8] sm:$0xff] %vm347, %v979
        %1012 = vst.msk [vmem:[%s282 + $0xd0] sm:$0xff] %vm347, %v980
        %1013 = vst.msk [vmem:[%s282 + $0xd8] sm:$0xff] %vm347, %v981
        %1014 = vst.msk [vmem:[%s282 + $0xe0] sm:$0xff] %vm347, %v982
        %1015 = vst.msk [vmem:[%s282 + $0xe8] sm:$0xff] %vm347, %v983
        %1016 = vst.msk [vmem:[%s282 + $0xf0] sm:$0xff] %vm347, %v984
        %1017 = vst.msk [vmem:[%s282 + $0xf8] sm:$0xff] %vm347, %v985
        %s1018 = sand.u32 %s148, 1
        %s1019 = scalar_lea.sflag [#allocation4], %s1018
        %s1020 = sand.u32 %s148, 1
        %s1021 = smul.addr %s1020, 256
        %s1022 = scalar_lea.vmem [#allocation7], %s1021
        // Predicated region
        $region49: #{chx_forward.1} parent=39 // pred_check
          %p1023 = pneg %p158
        $region50: #{chx_forward.1} parent=39 // pred_check_branch
          %1025 = sbr.rel (%p1023) target = $region52
        $region51: #{chx_forward.1} parent=39 // pred_region
          %s1027 = ssub.s32 4096, 4096
          %1028 = vsyncadd %s1019, %s1027
          %s1029 = smul.addr %s25, 32
          %s1030 = smul.addr %s1029, 128
          %s1031 = scalar_lea.hbm %s5, %s1030
          %s1032 = sshll.u32 %s1022, 4
          %s1033 = int_to_ptr.vmem [resolvable:$true] %s1032
          %1038 = dma.vmem_to_hbm [thread:$0]  %s1033, 4096, %s1031, %s1019, 128, 128, 8
        $region52: #{chx_forward.1} parent=39 // pred_fallthru
          _
      $region40: #{chx_forward.1} parent=5 // pred_fallthru
        _
      %p1039 = scmp.le.s32.totalorder 2, %s20
      // Predicated region
      $region53: #{chx_forward.1} parent=5 // pred_check
        %p1040 = pneg %p1039
      $region54: #{chx_forward.1} parent=5 // pred_check_branch
        %1042 = sbr.rel (%p1040) target = $region56
      $region55: #{chx_forward.1} parent=5 // pred_region
        %s1043 = ssub.s32 %s20, 2
        // Predicated region
        $region57: #{chx_forward.1} parent=55 // pred_check
          %p1044 = pneg %p164
        $region58: #{chx_forward.1} parent=55 // pred_check_branch
          %1046 = sbr.rel (%p1044) target = $region60
        $region59: #{chx_forward.1} parent=55 // pred_region
          %s1047 = sand.u32 %s149, 1
          %s1048 = scalar_lea.sflag [#allocation4], %s1047
          %s1049 = sand.u32 %s149, 1
          %s1050 = smul.addr %s1049, 256
          %s1051 = scalar_lea.vmem [#allocation7], %s1050
          %1052 = dma.done %s1048, 4096
        $region60: #{chx_forward.1} parent=55 // pred_fallthru
          _
      $region56: #{chx_forward.1} parent=5 // pred_fallthru
        _
    $region6: #{chx_forward.1} parent=1 // loop_footer
      %s24 = sadd.s32 1, %s20
    $region7: #{chx_forward.1} parent=1 // loop_footer_branch
      %19 = sbr.rel target = $region3
    $region8: #{chx_forward.1} parent=1 // loop_exit
      _
    %1053 = vsyncpa [#allocation3], 1
    %s1054 = scalar_lea.sflag [#allocation3], 1
    %1055 = vsyncpa %s1054, 1
    %1056 = vsyncpa [#allocation6], 1
    %s1057 = scalar_lea.sflag [#allocation6], 1
    %1058 = vsyncpa %s1057, 1
    %1059 = vsyncpa [#allocation4], 1
    %s1060 = scalar_lea.sflag [#allocation4], 1
    %1061 = vsyncpa %s1060, 1

</llo_original>
